<compile_context>
chip_gen: v7x
topology: tpu7x:2x2x1
jax: 0.10.0
libtpu: 0.0.40
codegen_flags: <defaults>
</compile_context>

<pallas_src>
import jax
import jax.numpy as jnp
from jax.experimental import pallas as pl
from jax.experimental.pallas import tpu as pltpu

NEG_SLOPE = 0.01  # nn.LeakyReLU default negative_slope


def _round_up(v, m):
    return ((v + m - 1) // m) * m


def _sublane_align(dtype):
    it = jnp.dtype(dtype).itemsize
    return {4: 8, 2: 16, 1: 32}.get(it, 8)


def _vmem_capacity_bytes():
    try:
        info = pltpu.get_tpu_info()
        cap = getattr(info, "vmem_capacity_bytes", None)
        if cap:
            return int(cap)
    except Exception:
        pass
    return 64 * 1024 * 1024  # conservative (v7x) fallback


def _vmem_budget():
    cap = _vmem_capacity_bytes()
    # Per-step tile budget (double-buffering counted explicitly below).
    budget = max(8 << 20, min(int(cap * 0.40), 48 << 20))
    return cap, budget


# ----------------------------- kernels ------------------------------------ #

def _kernel_fused(x_ref, w_ref, b_ref, o_ref):
    # x: (TB, K)  w: (K, TN)  b: (1, TN)  o: (TB, TN).  Whole K in one tile:
    # no scratch round-trip — matmul -> bias -> LeakyReLU -> store.
    y = jnp.dot(x_ref[...], w_ref[...], preferred_element_type=jnp.float32)
    y = y + b_ref[...].astype(jnp.float32)
    o_ref[...] = jnp.maximum(y, NEG_SLOPE * y).astype(o_ref.dtype)


def _kernel_ktiled(x_ref, w_ref, b_ref, o_ref, acc_ref):
    # K tiled: f32 accumulator scratch persists over the (last, "arbitrary") K axis.
    k = pl.program_id(2)

    @pl.when(k == 0)
    def _():
        acc_ref[...] = jnp.zeros_like(acc_ref)

    acc_ref[...] += jnp.dot(x_ref[...], w_ref[...],
                            preferred_element_type=jnp.float32)

    @pl.when(k == pl.num_programs(2) - 1)
    def _():
        y = acc_ref[...] + b_ref[...].astype(jnp.float32)
        o_ref[...] = jnp.maximum(y, NEG_SLOPE * y).astype(o_ref.dtype)


# --------------------- one-time parameter preparation ---------------------- #

class VecEncoderParams:
    """Pre-transposed / padded parameters + tiling chosen at init time."""

    def __init__(self, w_kn, b_2d, n, k, block_n, block_k):
        self.w_kn = w_kn          # (K_pad, N_pad), weight.T padded
        self.b_2d = b_2d          # (1, N_pad)
        self.n = n                # logical out_features
        self.k = k                # logical in_features
        self.block_n = block_n
        self.block_k = block_k


def prepare_vec_encoder(weight, bias, *, compute_dtype=None):
    """Do ONCE at model init (not per forward call): transpose W to (K, N),
    pad K/N to tile-aligned sizes, optionally cast to bf16 (opt-in, changes numerics)."""
    N, K = weight.shape
    if compute_dtype is not None:
        weight = weight.astype(compute_dtype)
    dtype = weight.dtype
    it = jnp.dtype(dtype).itemsize
    align = _sublane_align(dtype)

    _, budget = _vmem_budget()

    block_n = min(_round_up(N, 128), 256)   # lane-dense output / weight tiles
    K_full = _round_up(K, align)

    ref_bb = 256  # worst-case batch tile assumed when sizing K

    def footprint(bk, with_acc):
        f = 2 * (ref_bb * bk + bk * block_n) * it   # double-buffered x + W tiles
        f += 2 * block_n * it                       # bias
        f += 2 * ref_bb * block_n * it              # output tile
        if with_acc:
            f += ref_bb * block_n * 4               # f32 accumulator scratch
        return f

    if footprint(K_full, False) <= budget:
        block_k = K_full                            # common case: K untiled
    else:
        block_k = 128
        for cand in (4096, 2048, 1024, 512, 256, 128):
            if cand <= _round_up(K_full, 128) and footprint(cand, True) <= budget:
                block_k = cand
                break

    K_pad = _round_up(K, block_k)
    N_pad = _round_up(N, block_n)

    # Pad + transpose ONCE here, outside the hot path.
    w_kn = jnp.zeros((K_pad, N_pad), dtype).at[:K, :N].set(weight.T)
    b_2d = jnp.zeros((1, N_pad), bias.dtype).at[:, :N].set(bias)
    return VecEncoderParams(w_kn, b_2d, N, K, block_n, block_k)


# ------------------------------ forward ------------------------------------ #

def vec_encoder(x, params):
    """y = LeakyReLU(x @ W.T + b).  x: (B, in_features), dtype matching prepared W."""
    B, K = x.shape
    assert K == params.k, "in_features mismatch"
    w, b2d = params.w_kn, params.b_2d
    assert x.dtype == w.dtype, (
        "x and weight must share a dtype (cast x, or prepare with compute_dtype)")

    dtype = x.dtype
    it = jnp.dtype(dtype).itemsize
    align = _sublane_align(dtype)
    K_pad, N_pad = w.shape
    block_n, block_k = params.block_n, params.block_k
    k_tiles = K_pad // block_k
    tiled_k = k_tiles > 1

    cap, budget = _vmem_budget()

    def footprint(bb):
        f = 2 * (bb * block_k + block_k * block_n) * it
        f += 2 * block_n * it
        f += 2 * bb * block_n * it
        if tiled_k:
            f += bb * block_n * 4
        return f

    # Batch tile: as big as the VMEM budget allows (fewer ~0.35 us grid steps,
    # more W reuse per x DMA), capped at 512 rows.
    block_b = min(_round_up(B, align), 512)
    while block_b > align and footprint(block_b) > budget:
        block_b = max(align, _round_up(block_b // 2, align))

    B_pad = _round_up(B, block_b)
    b_tiles = B_pad // block_b
    n_tiles = N_pad // block_n

    # v7x has 2 TensorCores sharded over "parallel" axes: if the whole problem is
    # one tile, split the batch so both cores get work.
    if n_tiles * b_tiles == 1 and B_pad >= 2 * align:
        block_b = _round_up(pl.cdiv(B_pad, 2), align)
        B_pad = _round_up(B, block_b)
        b_tiles = B_pad // block_b

    # Only x may need padding per call (zero rows/cols are inert; sliced off below).
    if B_pad != B or K_pad != K:
        x_p = jnp.zeros((B_pad, K_pad), dtype).at[:B, :K].set(x)
    else:
        x_p = x

    # Advisory cost estimate reflecting the actual HBM traffic of the chosen grid.
    if tiled_k:
        w_bytes = b_tiles * K_pad * N_pad * it       # W re-streamed per batch tile
    else:
        w_bytes = K_pad * N_pad * it                 # batch innermost -> W read once
    x_bytes = n_tiles * B_pad * K_pad * it           # x re-streamed per N tile
    cost = pl.CostEstimate(
        flops=2 * B_pad * K_pad * N_pad,
        transcendentals=0,
        bytes_accessed=(x_bytes + w_bytes
                        + N_pad * jnp.dtype(b2d.dtype).itemsize
                        + B_pad * N_pad * it),
    )

    vmem_limit = min(int(cap * 0.9), max(2 * footprint(block_b), 32 << 20))

    if not tiled_k:
        # Grid (N tiles, B tiles); batch is the innermost (fastest) axis and the
        # weight block index depends only on the N axis, so the pipeliner skips the
        # W DMA across consecutive batch tiles (weight-stationary).
        grid = (n_tiles, b_tiles)
        in_specs = [
            pl.BlockSpec((block_b, K_pad), lambda j, i: (i, 0)),   # x tile
            pl.BlockSpec((K_pad, block_n), lambda j, i: (0, j)),   # W (K,N), resident over i
            pl.BlockSpec((1, block_n),     lambda j, i: (0, j)),   # bias tile
        ]
        out_specs = pl.BlockSpec((block_b, block_n), lambda j, i: (i, j))
        scratch_shapes = []
        kernel = _kernel_fused
        dim_sem = ("parallel", "parallel")
    else:
        grid = (n_tiles, b_tiles, k_tiles)           # reduction axis last
        in_specs = [
            pl.BlockSpec((block_b, block_k), lambda j, i, k: (i, k)),
            pl.BlockSpec((block_k, block_n), lambda j, i, k: (k, j)),
            pl.BlockSpec((1, block_n),       lambda j, i, k: (0, j)),
        ]
        out_specs = pl.BlockSpec((block_b, block_n), lambda j, i, k: (i, j))
        scratch_shapes = [pltpu.VMEM((block_b, block_n), jnp.float32)]
        kernel = _kernel_ktiled
        dim_sem = ("parallel", "parallel", "arbitrary")

    out = pl.pallas_call(
        kernel,
        out_shape=jax.ShapeDtypeStruct((B_pad, N_pad), dtype),
        grid_spec=pltpu.PrefetchScalarGridSpec(
            num_scalar_prefetch=0,
            grid=grid,
            in_specs=in_specs,
            out_specs=out_specs,
            scratch_shapes=scratch_shapes,
        ),
        compiler_params=pltpu.CompilerParams(
            dimension_semantics=dim_sem,
            vmem_limit_bytes=vmem_limit,
        ),
        cost_estimate=cost,
    )(x_p, w, b2d)

    return out[:B, :params.n]


def reference(x, weight, bias):
    y = x @ weight.T + bias
    return jnp.maximum(y, NEG_SLOPE * y)


if __name__ == "__main__":
    key = jax.random.PRNGKey(0)
    k_x, k_w, k_b = jax.random.split(key, 3)

    B = 8               # batch of vectors
    IN_FEATURES = 32    # params[0]
    OUT_FEATURES = 64   # params[1]

    x = jax.random.normal(k_x, (B, IN_FEATURES), dtype=jnp.float32)
    # Deterministic synthetic parameters (shapes match nn.Linear(params[0], params[1])).
    weight = jax.random.normal(k_w, (OUT_FEATURES, IN_FEATURES), dtype=jnp.float32) * 0.1
    bias = jax.random.normal(k_b, (OUT_FEATURES,), dtype=jnp.float32) * 0.1

    params = prepare_vec_encoder(weight, bias)   # one-time, init-style prep
    out = jax.block_until_ready(vec_encoder(x, params))

    ref = reference(x, weight, bias)
    assert out.shape == (B, OUT_FEATURES)
    assert jnp.allclose(out, ref, atol=1e-5, rtol=1e-5), "mismatch vs reference"

    print("KERNEL_OK")
</pallas_src>

<mosaic_0001>
module attributes {stable_mosaic.version = 11 : i64} {
  func.func @_kernel_fused(%arg0: i32, %arg1: i32, %arg2: memref<8x32xf32, #tpu.memory_space<vmem>>, %arg3: memref<32x128xf32, #tpu.memory_space<vmem>>, %arg4: memref<1x128xf32, #tpu.memory_space<vmem>>, %arg5: memref<8x128xf32, #tpu.memory_space<vmem>>) attributes {dimension_semantics = [#tpu.dimension_semantics<parallel>, #tpu.dimension_semantics<parallel>], iteration_bounds = array<i64: 1, 1>, scalar_prefetch = 0 : i64, scratch_operands = 0 : i64, tpu.core_type = #tpu.core_type<tc>, window_params = [{transform_indices = @transform_0, window_bounds = array<i64: 8, 32>}, {transform_indices = @transform_1, window_bounds = array<i64: 32, 128>}, {transform_indices = @transform_2, window_bounds = array<i64: 1, 128>}, {transform_indices = @transform_3, window_bounds = array<i64: 8, 128>}]} {
    %c0 = arith.constant 0 : index
    %c0_0 = arith.constant 0 : index
    %0 = vector.load %arg2[%c0, %c0_0] : memref<8x32xf32, #tpu.memory_space<vmem>>, vector<8x32xf32>
    %c0_1 = arith.constant 0 : index
    %c0_2 = arith.constant 0 : index
    %1 = vector.load %arg3[%c0_1, %c0_2] : memref<32x128xf32, #tpu.memory_space<vmem>>, vector<32x128xf32>
    %cst = arith.constant dense<0.000000e+00> : vector<8x128xf32>
    %2 = tpu.matmul %0, %1, %cst {dimension_numbers = #tpu.dot_dimension_numbers<[1], [0], [0], [1], [0, 0, 1, 1], [], []>} : vector<8x32xf32>, vector<32x128xf32>, vector<8x128xf32> -> vector<8x128xf32>
    %c0_3 = arith.constant 0 : index
    %c0_4 = arith.constant 0 : index
    %3 = vector.load %arg4[%c0_3, %c0_4] : memref<1x128xf32, #tpu.memory_space<vmem>>, vector<1x128xf32>
    %4 = vector.broadcast %3 : vector<1x128xf32> to vector<8x128xf32>
    %5 = arith.addf %2, %4 : vector<8x128xf32>
    %cst_5 = arith.constant 0.00999999977 : f32
    %6 = vector.broadcast %cst_5 : f32 to vector<8x128xf32>
    %7 = arith.mulf %6, %5 : vector<8x128xf32>
    %8 = arith.maximumf %5, %7 : vector<8x128xf32>
    %c0_6 = arith.constant 0 : index
    %c0_7 = arith.constant 0 : index
    %9 = vector.load %arg5[%c0_6, %c0_7] : memref<8x128xf32, #tpu.memory_space<vmem>>, vector<8x128xf32>
    tpu.vector_store %arg5[%c0_6, %c0_7], %8 {strides = array<i32>} : memref<8x128xf32, #tpu.memory_space<vmem>>, vector<8x128xf32>,
    return
  }
  func.func @transform_0(%arg0: i32, %arg1: i32) -> (i32, i32) {
    %c0_i32 = arith.constant 0 : i32
    %c0_i32_0 = arith.constant 0 : i32
    return %arg1, %c0_i32 : i32, i32
  }
  func.func @transform_1(%arg0: i32, %arg1: i32) -> (i32, i32) {
    %c0_i32 = arith.constant 0 : i32
    %c0_i32_0 = arith.constant 0 : i32
    return %c0_i32, %arg0 : i32, i32
  }
  func.func @transform_2(%arg0: i32, %arg1: i32) -> (i32, i32) {
    %c0_i32 = arith.constant 0 : i32
    %c0_i32_0 = arith.constant 0 : i32
    return %c0_i32, %arg0 : i32, i32
  }
  func.func @transform_3(%arg0: i32, %arg1: i32) -> (i32, i32) {
    %c0_i32 = arith.constant 0 : i32
    return %arg1, %arg0 : i32, i32
  }
}

</mosaic_0001>

<llo_original>
// kernel: tpu_custom_call.1
$region0: #{tpu_custom_call.1}
  #allocation0 [shape = 'u32[]', space=smem, size = 0x4, offset = 0x4, fixed_abs, tag = 'smem constant byte address 0x4 - core index']
  #allocation1 [shape = 'u32[144,128]{1,0:T(1,128)}', space=vmem, size = 0x12000, scoped, tag = 'internal scratch']
  %s0 = inlined_call_operand.hbm [shape: f32[8,32], index: 0, kind: input, shape index: {}]
  %s1 = inlined_call_operand.hbm [shape: f32[32,128], index: 1, kind: input, shape index: {}]
  %s2 = inlined_call_operand.vmem [shape: f32[1,128], index: 2, kind: input, shape index: {}]
  %s3 = inlined_call_operand.hbm [shape: f32[8,128], index: 3, kind: output, shape index: {}]
  %s4 = sld [smem:[#allocation0]]
  $region30: #{tpu_custom_call.1} parent=0
    _
  %s6 = ssub.s32 1, %s4
  %s7 = scalar_select 0, %s6, %s4
  $region1: #{tpu_custom_call.1} parent=0
    #allocation2 [shape = 'u8[4096]{0}', space=vmem, size = 0x1000, scoped, tag = 'input window, operand 0, single buffered']
    #allocation3 [shape = 's32[1]{0}', space=sflag, size = 0x4, scoped, tag = 'scoped memory for tpu_custom_call.1']
    #allocation4 [shape = 's32[1]{0}', space=sflag, size = 0x4, scoped, tag = 'scoped memory for tpu_custom_call.1']
    #allocation5 [shape = 'u8[16384]{0}', space=vmem, size = 0x4000, scoped, tag = 'input window, operand 1, single buffered']
    #allocation6 [shape = 's32[1]{0}', space=sflag, size = 0x4, scoped, tag = 'scoped memory for tpu_custom_call.1']
    #allocation7 [shape = 'u8[4096]{0}', space=vmem, size = 0x1000, scoped, tag = 'output window, operand 0, single buffered']
    %8 = vsyncpa [#allocation3], 0
    %9 = vsyncpa [#allocation6], 0
    %10 = vsyncpa [#allocation4], 0
    // Predicated region
    $region2: #{tpu_custom_call.1} parent=1 // pred_check
      _
    $region3: #{tpu_custom_call.1} parent=1 // pred_check_branch
      %12 = sbr.rel (0) target = $region5
    $region4: #{tpu_custom_call.1} parent=1 // pred_region
      %s14 = ssub.s32 128, 128
      %15 = vsyncadd [#allocation3], %s14
      %s17 = sshll.u32 [#allocation2], 4
      %s18 = int_to_ptr.vmem [resolvable:$true] %s17
      %20 = dma.hbm_to_vmem [thread:$0]  %s0, 128, %s18, [#allocation3]
    $region5: #{tpu_custom_call.1} parent=1 // pred_fallthru
      _
    // Predicated region
    $region6: #{tpu_custom_call.1} parent=1 // pred_check
      _
    $region7: #{tpu_custom_call.1} parent=1 // pred_check_branch
      %22 = sbr.rel (0) target = $region9
    $region8: #{tpu_custom_call.1} parent=1 // pred_region
      %s24 = ssub.s32 512, 512
      %25 = vsyncadd [#allocation6], %s24
      %s26 = sshll.u32 [#allocation5], 4
      %s27 = int_to_ptr.vmem [resolvable:$true] %s26
      %32 = dma.hbm_to_vmem [thread:$0]  %s1, 512, %s27, [#allocation6], 128, 128, 8
    $region9: #{tpu_custom_call.1} parent=1 // pred_fallthru
      _
    // Predicated region
    $region10: #{tpu_custom_call.1} parent=1 // pred_check
      _
    $region11: #{tpu_custom_call.1} parent=1 // pred_check_branch
      %34 = sbr.rel (0) target = $region13
    $region12: #{tpu_custom_call.1} parent=1 // pred_region
      _
    $region13: #{tpu_custom_call.1} parent=1 // pred_fallthru
      _
    // Predicated region
    $region14: #{tpu_custom_call.1} parent=1 // pred_check
      _
    $region15: #{tpu_custom_call.1} parent=1 // pred_check_branch
      %36 = sbr.rel (0) target = $region17
    $region16: #{tpu_custom_call.1} parent=1 // pred_region
      %37 = dma.done [#allocation3], 128
    $region17: #{tpu_custom_call.1} parent=1 // pred_fallthru
      _
    // Predicated region
    $region18: #{tpu_custom_call.1} parent=1 // pred_check
      _
    $region19: #{tpu_custom_call.1} parent=1 // pred_check_branch
      %39 = sbr.rel (0) target = $region21
    $region20: #{tpu_custom_call.1} parent=1 // pred_region
      %40 = dma.done [#allocation6], 512
    $region21: #{tpu_custom_call.1} parent=1 // pred_fallthru
      _
    %v41 = vld [vmem:[#allocation2] sm:$0xff]
    %v42 = vld [vmem:[#allocation5] sm:$0xff]
    %v43 = vld [vmem:[#allocation5 + $0x8] sm:$0xff]
    %v44 = vld [vmem:[#allocation5 + $0x10] sm:$0xff]
    %v45 = vld [vmem:[#allocation5 + $0x18] sm:$0xff]
    %v46 = vld [vmem:[%s2] sm:$0x1]
    %v48 = vlaneseq
    %v49 = vshrl.u32 %v48, 7
    %v50 = vsub.s32 0, %v49
    %v51 = vrot.slane %v46, %v50
    %vm53 = vcmask 261120
    %v55 = vsel %vm53, %v41, 0
    %57 = vmatprep.subr.mxu0 0.0
    %58 = vmatpush1.msra.mxu0 %v42
    %59 = vmatprep.subr.mxu0 0.0
    %60 = vmatpush1.msra.mxu0 %v43
    %61 = vmatprep.subr.mxu0 0.0
    %62 = vmatpush1.msra.mxu0 %v44
    %63 = vmatprep.subr.mxu0 0.0
    %64 = vmatpush1.msra.mxu0 %v45
    %65 = vmatprep.subr.mxu0 0.0
    %66 = vmatpush1.msra.mxu0 0.0
    %67 = vmatprep.subr.mxu0 0.0
    %68 = vmatpush1.msra.mxu0 0.0
    %69 = vmatprep.subr.mxu0 0.0
    %70 = vmatpush1.msra.mxu0 0.0
    %71 = vmatprep.subr.mxu0 0.0
    %72 = vmatpush1.msra.mxu0 0.0
    %73 = vmatprep.subr.mxu0 0.0
    %74 = vmatpush1.msra.mxu0 0.0
    %75 = vmatprep.subr.mxu0 0.0
    %76 = vmatpush1.msra.mxu0 0.0
    %77 = vmatprep.subr.mxu0 0.0
    %78 = vmatpush1.msra.mxu0 0.0
    %79 = vmatprep.subr.mxu0 0.0
    %80 = vmatpush1.msra.mxu0 0.0
    %81 = vmatprep.subr.mxu0 0.0
    %82 = vmatpush1.msra.mxu0 0.0
    %83 = vmatprep.subr.mxu0 0.0
    %84 = vmatpush1.msra.mxu0 0.0
    %85 = vmatprep.subr.mxu0 0.0
    %86 = vmatpush1.msra.mxu0 0.0
    %87 = vmatprep.subr.mxu0 0.0
    %88 = vmatpush1.msra.mxu0 0.0
    %89 = vmatprep.subr.mxu0 0.0
    %90 = vmatpush1.msra.mxu0 0.0
    %91 = vmatprep.subr.mxu0 0.0
    %92 = vmatpush1.msra.mxu0 0.0
    %93 = vmatprep.subr.mxu0 0.0
    %94 = vmatpush1.msra.mxu0 0.0
    %95 = vmatprep.subr.mxu0 0.0
    %96 = vmatpush1.msra.mxu0 0.0
    %97 = vmatprep.subr.mxu0 0.0
    %98 = vmatpush1.msra.mxu0 0.0
    %99 = vmatprep.subr.mxu0 0.0
    %100 = vmatpush1.msra.mxu0 0.0
    %101 = vmatprep.subr.mxu0 0.0
    %102 = vmatpush1.msra.mxu0 0.0
    %103 = vmatprep.subr.mxu0 0.0
    %104 = vmatpush1.msra.mxu0 0.0
    %105 = vmatprep.subr.mxu0 0.0
    %106 = vmatpush1.msra.mxu0 0.0
    %107 = vmatprep.subr.mxu0 0.0
    %108 = vmatpush1.msra.mxu0 0.0
    %109 = vmatprep.subr.mxu0 0.0
    %110 = vmatpush1.msra.mxu0 0.0
    %111 = vmatprep.subr.mxu0 0.0
    %112 = vmatpush1.msra.mxu0 0.0
    %113 = vmatprep.subr.mxu0 0.0
    %114 = vmatpush1.msra.mxu0 0.0
    %115 = vmatprep.subr.mxu0 0.0
    %116 = vmatpush1.msra.mxu0 0.0
    %117 = vmatprep.subr.mxu0 0.0
    %118 = vmatpush1.msra.mxu0 0.0
    %119 = vmatprep.subr.mxu0 0.0
    %120 = vmatpush1.msra.mxu0 0.0
    %121 = vmatprep.mubr.f32.mxu0 0.0
    %122 = vmatmul.mubr.f32.gmra.mrb[0].mxu0 %v55
    %v123 = vpop.f32.mrb[0].mxu0
    %v124 = vadd.f32 %v51, %v123
    %v125 = vpop.f32.mrb[0].mxu0
    %126 = vdwg.mxu0
    %v127 = vmul.f32 %v124, 0.01
    %v128 = vmax.f32 %v124, %v127
    %129 = vst [vmem:[#allocation7] sm:$0xff] %v128
    // Predicated region
    $region22: #{tpu_custom_call.1} parent=1 // pred_check
      _
    $region23: #{tpu_custom_call.1} parent=1 // pred_check_branch
      %131 = sbr.rel (0) target = $region25
    $region24: #{tpu_custom_call.1} parent=1 // pred_region
      %s133 = ssub.s32 128, 128
      %134 = vsyncadd [#allocation4], %s133
      %s136 = sshll.u32 [#allocation7], 4
      %s137 = int_to_ptr.vmem [resolvable:$true] %s136
      %139 = dma.vmem_to_hbm [thread:$0]  %s137, 128, %s3, [#allocation4]
    $region25: #{tpu_custom_call.1} parent=1 // pred_fallthru
      _
    // Predicated region
    $region26: #{tpu_custom_call.1} parent=1 // pred_check
      _
    $region27: #{tpu_custom_call.1} parent=1 // pred_check_branch
      %141 = sbr.rel (0) target = $region29
    $region28: #{tpu_custom_call.1} parent=1 // pred_region
      %142 = dma.done [#allocation4], 128
    $region29: #{tpu_custom_call.1} parent=1 // pred_fallthru
      _
    %143 = vsyncpa [#allocation3], 1
    %144 = vsyncpa [#allocation6], 1
    %145 = vsyncpa [#allocation4], 1

</llo_original>
